<compile_context>
chip_gen: v7x
topology: tpu7x:2x2x1
jax: 0.10.0
libtpu: 0.0.40
codegen_flags: <defaults>
</compile_context>

<pallas_src>
from functools import partial

import jax
import jax.numpy as jnp
from jax.experimental import pallas as pl
from jax.experimental.pallas import tpu as pltpu


def _round_up(x, m):
    return (x + m - 1) // m * m


def _cdiv(a, b):
    return (a + b - 1) // b


# ----------------------------------------------------------------------------
# Kernels
# ----------------------------------------------------------------------------
def _uniform_hw_prng_kernel(seed_ref, out_ref):
    """TPU path: fill out_ref (lane-dense f32 tile) with uniform [0,1)."""
    # Block ids are separate seed words -> no collisions across calls with
    # consecutive seeds and no repeated tiles across the (row, lane) grid.
    pltpu.prng_seed(seed_ref[0], pl.program_id(0), pl.program_id(1))
    bits = pltpu.prng_random_bits(out_ref.shape)
    if bits.dtype != jnp.uint32:
        bits = pltpu.bitcast(bits, jnp.uint32)  # avoid sign-extending shifts
    # 23 random mantissa bits, exponent forced to 127 -> [1, 2); minus 1 -> [0, 1).
    mant = (bits >> jnp.uint32(9)) | jnp.uint32(0x3F800000)
    out_ref[...] = pltpu.bitcast(mant, jnp.float32) - jnp.float32(1.0)


def _uniform_from_bits_kernel(bits_ref, out_ref):
    """Fallback path (non-TPU / interpret): convert uint32 bits to uniform [0,1)."""
    bits = bits_ref[...]
    mant = (bits >> jnp.uint32(9)) | jnp.uint32(0x3F800000)
    out_ref[...] = jax.lax.bitcast_convert_type(mant, jnp.float32) - jnp.float32(1.0)


# ----------------------------------------------------------------------------
# Tiling heuristics
# ----------------------------------------------------------------------------
def _block_budget_bytes():
    """Per-block byte budget, generation-aware (smaller on v5-class chips)."""
    try:
        kind = jax.devices()[0].device_kind.lower()
    except Exception:
        kind = ""
    return (4 << 20) if "v5" in kind else (8 << 20)


def _choose_blocks(B, T, budget_bytes):
    """Pick (rb, cb, Bp, Tp): lane-dense block shape and padded slab size."""
    elt = 4  # f32
    Bp0 = _round_up(max(B, 1), 8)
    Tp0 = _round_up(max(T, 1), 128)

    # Lane (column) block: full width if an 8-row stripe fits the budget,
    # otherwise split T into roughly equal blocks (multiples of 512 lanes).
    if 8 * Tp0 * elt <= budget_bytes:
        cb = Tp0
    else:
        n_col = _cdiv(8 * Tp0 * elt, budget_bytes)
        cb = min(_round_up(_cdiv(Tp0, n_col), 512), Tp0)
    Tp = _round_up(Tp0, cb)

    # Row block: as many 8-row groups as still fit the budget with this cb.
    rb = max(8, (budget_bytes // (cb * elt)) // 8 * 8)
    rb = min(rb, Bp0)
    Bp = _round_up(Bp0, rb)

    # Megacore guarantee (v7x has 2 TCs): a *large* slab should never collapse
    # to a single block.  Tiny slabs stay single-block (grid overhead > gain).
    slab_bytes = Bp * Tp * elt
    if (Bp // rb) * (Tp // cb) == 1 and slab_bytes >= (1 << 20):
        if Bp0 >= 16:
            rb = _round_up(_cdiv(Bp0, 2), 8)
            Bp = _round_up(Bp0, rb)
        elif Tp0 >= 256:
            cb = _round_up(_cdiv(Tp0, 2), 128)
            Tp = _round_up(Tp0, cb)
    return rb, cb, Bp, Tp


# ----------------------------------------------------------------------------
# Jitted scores computation
# ----------------------------------------------------------------------------
@partial(jax.jit, static_argnames=("B", "T"))
def _uniform_scores(seed_arr, *, B, T):
    """Uniform [0,1) scores of shape (B, T), generated by a Pallas kernel."""
    rb, cb, Bp, Tp = _choose_blocks(B, T, _block_budget_bytes())
    out_shape = jax.ShapeDtypeStruct((Bp, Tp), jnp.float32)

    if jax.default_backend() == "tpu":
        grid = (Bp // rb, Tp // cb)
        padded = pl.pallas_call(
            _uniform_hw_prng_kernel,
            out_shape=out_shape,
            grid_spec=pltpu.PrefetchScalarGridSpec(
                num_scalar_prefetch=1,
                grid=grid,
                in_specs=[],
                out_specs=pl.BlockSpec((rb, cb), lambda i, j, seed_ref: (i, j)),
            ),
            compiler_params=pltpu.CompilerParams(
                # Every block is independent -> both axes shardable across TCs.
                dimension_semantics=("parallel", "parallel"),
                # Explicit limit so 2x double-buffered 8 MiB blocks fit on all
                # of v5e / v6e / v7x without relying on per-gen defaults.
                vmem_limit_bytes=32 << 20,
            ),
        )(seed_arr)
    else:
        # Non-TPU backend / interpret sandbox: the Mosaic hardware-PRNG
        # primitives have no lowering there, so draw raw bits with jax.random
        # and do the uniform conversion + lane-dense store inside Pallas.
        bits = jax.random.bits(jax.random.PRNGKey(seed_arr[0]), (Bp, Tp), jnp.uint32)
        padded = pl.pallas_call(_uniform_from_bits_kernel, out_shape=out_shape)(bits)

    if (Bp, Tp) == (B, T):
        return padded
    # Under jit this slice is fused/elided by XLA (no eager extra HBM pass).
    return padded[:B, :T]


# ----------------------------------------------------------------------------
# Module wrapper
# ----------------------------------------------------------------------------
def init_params(key):
    """Deterministic init of the module's (unused) Linear(1,1) layers."""
    ks = jax.random.split(key, 6)

    def lin(kw, kb):
        # PyTorch nn.Linear(1,1) default init: U(-1, 1) since fan_in = 1.
        w = jax.random.uniform(kw, (1, 1), jnp.float32, -1.0, 1.0)
        b = jax.random.uniform(kb, (1,), jnp.float32, -1.0, 1.0)
        return {"weight": w, "bias": b}

    return {
        "score_net": lin(ks[0], ks[1]),
        "topic_net": lin(ks[2], ks[3]),
        "query_decoder": lin(ks[4], ks[5]),
    }


def shot_random_guess_forward(params, batch, shot_query, seed=0):
    """Pallas equivalent of ShotRandomGuess.forward.

    batch      : (B, T, D) shot features (only the shape is used).
    shot_query : (B, D) query features (unused, as in the reference).
    seed       : int or int32 device scalar (pass a device scalar to avoid the
                 per-call host->device transfer).
    Returns (overall_scores, aux_dict) exactly like the PyTorch module.
    """
    del shot_query  # unused by the reference forward
    # TODO(synk): params (score_net / topic_net / query_decoder) are carried
    # but never used, mirroring the reference module exactly.
    del params

    B, T = int(batch.shape[0]), int(batch.shape[1])
    seed_arr = jnp.asarray(seed, dtype=jnp.int32).reshape((1,))
    overall_scores = _uniform_scores(seed_arr, B=B, T=T)
    aux = {"topic_probs": None, "all_scores": None, "prior_loss": 0}
    return overall_scores, aux


if __name__ == "__main__":
    key = jax.random.PRNGKey(0)
    k_params, k_batch, k_query = jax.random.split(key, 3)

    B, T, D = 2, 8, 32  # batch=2, 8 shots, 32-dim features
    params = init_params(k_params)
    batch = jax.random.normal(k_batch, (B, T, D), dtype=jnp.float32)
    shot_query = jax.random.normal(k_query, (B, D), dtype=jnp.float32)

    scores, aux = shot_random_guess_forward(params, batch, shot_query, seed=0)
    scores = jax.block_until_ready(scores)

    assert scores.shape == (B, T)
    assert scores.dtype == jnp.float32
    assert bool(jnp.all(scores >= 0.0)) and bool(jnp.all(scores < 1.0))
    assert aux["topic_probs"] is None and aux["all_scores"] is None
    assert aux["prior_loss"] == 0

    # Medium shape: exercises the multi-block grid (>= 2 blocks) and the
    # per-block seed perturbation (halves must not repeat).
    B2, T2 = 128, 8192
    batch2 = jnp.zeros((B2, T2, 1), dtype=jnp.float32)
    scores2, _ = shot_random_guess_forward(params, batch2, jnp.zeros((B2, 1)), seed=1)
    scores2 = jax.block_until_ready(scores2)
    assert scores2.shape == (B2, T2)
    assert bool(jnp.all(scores2 >= 0.0)) and bool(jnp.all(scores2 < 1.0))
    assert not bool(jnp.allclose(scores2[: B2 // 2], scores2[B2 // 2 :]))

    print("KERNEL_OK")
</pallas_src>

<mosaic_0001>
module attributes {stable_mosaic.version = 11 : i64} {
  func.func @_uniform_from_bits_kernel(%arg0: memref<8x128xi32, #tpu.memory_space<vmem>>, %arg1: memref<8x128xf32, #tpu.memory_space<vmem>>) attributes {dimension_semantics = [], scalar_prefetch = 0 : i64, scratch_operands = 0 : i64, tpu.core_type = #tpu.core_type<tc>} {
    %c0 = arith.constant 0 : index
    %c0_0 = arith.constant 0 : index
    %0 = vector.load %arg0[%c0, %c0_0] : memref<8x128xi32, #tpu.memory_space<vmem>>, vector<8x128xi32>
    %c9_i32 = arith.constant 9 : i32
    %1 = vector.broadcast %c9_i32 : i32 to vector<8x128xi32>
    %2 = arith.shrui %0, %1 : vector<8x128xi32>
    %c1065353216_i32 = arith.constant 1065353216 : i32
    %3 = vector.broadcast %c1065353216_i32 : i32 to vector<8x128xi32>
    %4 = arith.ori %2, %3 : vector<8x128xi32>
    %5 = tpu.bitcast %4 : vector<8x128xi32> -> vector<8x128xf32>
    %cst = arith.constant 1.000000e+00 : f32
    %6 = vector.broadcast %cst : f32 to vector<8x128xf32>
    %7 = arith.subf %5, %6 : vector<8x128xf32>
    %c0_1 = arith.constant 0 : index
    %c0_2 = arith.constant 0 : index
    %8 = vector.load %arg1[%c0_1, %c0_2] : memref<8x128xf32, #tpu.memory_space<vmem>>, vector<8x128xf32>
    tpu.vector_store %arg1[%c0_1, %c0_2], %7 {strides = array<i32>} : memref<8x128xf32, #tpu.memory_space<vmem>>, vector<8x128xf32>,
    return
  }
}

</mosaic_0001>

<llo_original>
// kernel: _uniform_scores.1
$region0: #{_uniform_scores.1}
  #allocation0 [shape = 'u32[]', space=smem, size = 0x4, offset = 0x4, fixed_abs, tag = 'smem constant byte address 0x4 - core index']
  #allocation1 [shape = 'u32[144,128]{1,0:T(1,128)}', space=vmem, size = 0x12000, scoped, tag = 'internal scratch']
  %s0 = inlined_call_operand.vmem [shape: u32[8,128], index: 0, kind: input, shape index: {}]
  %s1 = inlined_call_operand.vmem [shape: f32[8,128], index: 1, kind: output, shape index: {}]
  %s2 = sld [smem:[#allocation0]]
  $region14: #{_uniform_scores.1} parent=0
    _
  %s4 = ssub.s32 1, %s2
  %s5 = scalar_select 0, %s4, %s2
  // Predicated region
  $region2: #{_uniform_scores.1} parent=0 // pred_check
    _
  $region3: #{_uniform_scores.1} parent=0 // pred_check_branch
    %7 = sbr.rel (0) target = $region5
  $region4: #{_uniform_scores.1} parent=0 // pred_region
    _
  $region5: #{_uniform_scores.1} parent=0 // pred_fallthru
    _
  %v8 = vld [vmem:[%s0] sm:$0xff]
  %v9 = vshrl.u32 %v8, 9
  %v10 = vor.u32 %v9, 1065353216
  %v12 = vsub.f32 %v10, 1.0
  %13 = vst [vmem:[%s1] sm:$0xff] %v12
  // Predicated region
  $region6: #{_uniform_scores.1} parent=0 // pred_check
    _
  $region7: #{_uniform_scores.1} parent=0 // pred_check_branch
    %15 = sbr.rel (0) target = $region9
  $region8: #{_uniform_scores.1} parent=0 // pred_region
    _
  $region9: #{_uniform_scores.1} parent=0 // pred_fallthru
    _
  // Predicated region
  $region10: #{_uniform_scores.1} parent=0 // pred_check
    _
  $region11: #{_uniform_scores.1} parent=0 // pred_check_branch
    %17 = sbr.rel (0) target = $region13
  $region12: #{_uniform_scores.1} parent=0 // pred_region
    _
  $region13: #{_uniform_scores.1} parent=0 // pred_fallthru
    _

</llo_original>
